<compile_context>
chip_gen: v7x
topology: tpu7x:2x2x1
jax: 0.10.0
libtpu: 0.0.40
codegen_flags: <defaults>
</compile_context>

<pallas_src>
import functools

import jax
import jax.numpy as jnp
from jax.experimental import pallas as pl
from jax.experimental.pallas import tpu as pltpu


def _positional_kernel(x_ref, w_ref, b_ref, o_ref, xp_ref, *, C):
    # x_ref : (1, H, W*C)      unpadded input tile (one batch element)
    # w_ref : (9, W*C)         depthwise 3x3 taps, each tiled W times on lanes
    # b_ref : (1, W*C)         bias, tiled W times on lanes
    # o_ref : (1, H, W*C)      gated output
    # xp_ref: (H+2, (W+2)*C)   VMEM halo scratch (zero border + interior copy)
    H, WC = o_ref.shape[1], o_ref.shape[2]
    Hp, WCp = xp_ref.shape
    dt = xp_ref.dtype

    # Build the zero halo in VMEM (no HBM-level pad op): zero only the border,
    # then copy the interior from the input block.
    xp_ref[0:1, :] = jnp.zeros((1, WCp), dt)
    xp_ref[Hp - 1:Hp, :] = jnp.zeros((1, WCp), dt)
    xp_ref[:, 0:C] = jnp.zeros((Hp, C), dt)
    xp_ref[:, WCp - C:WCp] = jnp.zeros((Hp, C), dt)
    xp_ref[1:1 + H, C:C + WC] = x_ref[0]

    # Accumulator starts from the (single, hoisted) broadcast bias.
    acc = jnp.broadcast_to(b_ref[0, :].astype(jnp.float32), (H, WC))

    # Depthwise 3x3 = 9 shifted elementwise FMAs on the lane-flattened tile.
    # ki -> row (sublane) offset; kj -> static lane offset kj*C.
    for ki in range(3):
        for kj in range(3):
            win = xp_ref[ki:ki + H, kj * C:kj * C + WC].astype(jnp.float32)
            tap = w_ref[ki * 3 + kj, :].astype(jnp.float32)
            acc = acc + win * tap

    gate = jax.nn.sigmoid(acc)                        # EUP exp + VPU
    x_center = x_ref[0].astype(jnp.float32)
    o_ref[0] = (x_center * gate).astype(o_ref.dtype)
    # TODO(synk): on v6e/v7x the tap products / sigmoid could run in bf16
    # (keep f32 accumulation) for ~2x VPU throughput; kept f32 here so the
    # 1e-5 reference check holds.


def positional_forward(x_nhwc, w_dw, b):
    """x_nhwc: (N, H, W, C); w_dw: (3, 3, C); b: (C,). Returns (N, H, W, C)."""
    N, H, W, C = x_nhwc.shape
    WC = W * C

    # Free reshape: fold (W, C) into the lane axis (contiguous trailing dims).
    x_flat = x_nhwc.reshape(N, H, WC)
    # Tile taps / bias across W so they broadcast directly over the lane axis.
    w_flat = jnp.tile(w_dw.reshape(9, C), (1, W))     # (9, W*C): [t, j*C+c] = w[t, c]
    b_flat = jnp.tile(b, (W,)).reshape(1, WC)         # (1, W*C): [0, j*C+c] = b[c]

    # TODO(synk): for large H, add an H-tile grid axis with an explicit 1-row
    # halo (element-offset index_map / manual DMA) to keep tiles inside v7x's
    # 64 MiB VMEM and restore DMA/compute pipelining.
    kernel = functools.partial(_positional_kernel, C=C)
    out_flat = pl.pallas_call(
        kernel,
        out_shape=jax.ShapeDtypeStruct((N, H, WC), x_nhwc.dtype),
        grid_spec=pltpu.PrefetchScalarGridSpec(
            num_scalar_prefetch=0,
            grid=(N,),
            in_specs=[
                pl.BlockSpec((1, H, WC), lambda n: (n, 0, 0)),
                pl.BlockSpec((9, WC), lambda n: (0, 0)),
                pl.BlockSpec((1, WC), lambda n: (0, 0)),
            ],
            out_specs=pl.BlockSpec((1, H, WC), lambda n: (n, 0, 0)),
            scratch_shapes=[pltpu.VMEM((H + 2, (W + 2) * C), x_nhwc.dtype)],
        ),
        compiler_params=pltpu.CompilerParams(
            dimension_semantics=("parallel",)),
    )(x_flat, w_flat, b_flat)
    return out_flat.reshape(N, H, W, C)


def positional_reference(x_nhwc, w_dw, b):
    """Pure-JAX reference: SAME-padded depthwise conv + sigmoid gate."""
    C = x_nhwc.shape[-1]
    w_hwio = w_dw.reshape(3, 3, 1, C)  # HWIO with I=1, feature_group_count=C
    y = jax.lax.conv_general_dilated(
        x_nhwc, w_hwio, window_strides=(1, 1), padding="SAME",
        dimension_numbers=("NHWC", "HWIO", "NHWC"),
        feature_group_count=C)
    y = y + b
    return x_nhwc * jax.nn.sigmoid(y)


if __name__ == "__main__":
    key = jax.random.PRNGKey(0)
    k_x, k_w, k_b = jax.random.split(key, 3)

    N, C, H, W = 2, 32, 16, 16  # module: Positional(dim=C), input NCHW (N,C,H,W)
    x_nchw = jax.random.normal(k_x, (N, C, H, W), dtype=jnp.float32)

    # Deterministic param init (Conv2d(dim, dim, 3, padding=1, groups=dim)):
    # depthwise weight (C, 1, 3, 3) stored as (3, 3, C); bias (C,).
    fan_in = 3 * 3  # per-group in_channels(=1) * kh * kw
    bound = 1.0 / (fan_in ** 0.5)
    w_dw = jax.random.uniform(k_w, (3, 3, C), jnp.float32, -bound, bound)
    b = jax.random.uniform(k_b, (C,), jnp.float32, -bound, bound)

    # Test-only glue: the kernel is NHWC-native (a real model would stay NHWC
    # end-to-end instead of paying standalone transposes around every call).
    x_nhwc = jnp.transpose(x_nchw, (0, 2, 3, 1))

    out = positional_forward(x_nhwc, w_dw, b)
    out = jax.block_until_ready(out)

    ref = positional_reference(x_nhwc, w_dw, b)
    assert out.shape == (N, H, W, C)
    assert jnp.allclose(out, ref, atol=1e-5, rtol=1e-5), "mismatch vs reference"

    # Back to NCHW to match the PyTorch module's output convention.
    out_nchw = jnp.transpose(out, (0, 3, 1, 2))
    assert out_nchw.shape == x_nchw.shape

    print("KERNEL_OK")
</pallas_src>

<mosaic_0001>
module attributes {stable_mosaic.version = 11 : i64} {
  func.func @_positional_kernel(%arg0: i32, %arg1: memref<1x16x512xf32, #tpu.memory_space<vmem>>, %arg2: memref<9x512xf32, #tpu.memory_space<vmem>>, %arg3: memref<1x512xf32, #tpu.memory_space<vmem>>, %arg4: memref<1x16x512xf32, #tpu.memory_space<vmem>>, %arg5: memref<18x576xf32, #tpu.memory_space<vmem>>) attributes {dimension_semantics = [#tpu.dimension_semantics<parallel>], iteration_bounds = array<i64: 2>, scalar_prefetch = 0 : i64, scratch_operands = 1 : i64, tpu.core_type = #tpu.core_type<tc>, window_params = [{transform_indices = @transform_0, window_bounds = array<i64: 1, 16, 512>}, {pipeline_mode = #tpu.pipeline_mode<synchronous>, transform_indices = @transform_1, window_bounds = array<i64: 9, 512>}, {pipeline_mode = #tpu.pipeline_mode<synchronous>, transform_indices = @transform_2, window_bounds = array<i64: 1, 512>}, {transform_indices = @transform_3, window_bounds = array<i64: 1, 16, 512>}]} {
    %cst = arith.constant 0.000000e+00 : f32
    %0 = vector.broadcast %cst : f32 to vector<1x576xf32>
    %c0 = arith.constant 0 : index
    %c0_0 = arith.constant 0 : index
    %1 = vector.load %arg5[%c0, %c0_0] : memref<18x576xf32, #tpu.memory_space<vmem>>, vector<1x576xf32>
    tpu.vector_store %arg5[%c0, %c0_0], %0 {strides = array<i32>} : memref<18x576xf32, #tpu.memory_space<vmem>>, vector<1x576xf32>,
    %cst_1 = arith.constant 0.000000e+00 : f32
    %2 = vector.broadcast %cst_1 : f32 to vector<1x576xf32>
    %c17 = arith.constant 17 : index
    %c0_2 = arith.constant 0 : index
    %3 = vector.load %arg5[%c17, %c0_2] : memref<18x576xf32, #tpu.memory_space<vmem>>, vector<1x576xf32>
    tpu.vector_store %arg5[%c17, %c0_2], %2 {strides = array<i32>} : memref<18x576xf32, #tpu.memory_space<vmem>>, vector<1x576xf32>,
    %cst_3 = arith.constant 0.000000e+00 : f32
    %4 = vector.broadcast %cst_3 : f32 to vector<18x32xf32>
    %c0_4 = arith.constant 0 : index
    %c0_5 = arith.constant 0 : index
    %5 = vector.load %arg5[%c0_4, %c0_5] : memref<18x576xf32, #tpu.memory_space<vmem>>, vector<18x32xf32>
    tpu.vector_store %arg5[%c0_4, %c0_5], %4 {strides = array<i32>} : memref<18x576xf32, #tpu.memory_space<vmem>>, vector<18x32xf32>,
    %cst_6 = arith.constant 0.000000e+00 : f32
    %6 = vector.broadcast %cst_6 : f32 to vector<18x32xf32>
    %c0_7 = arith.constant 0 : index
    %c544 = arith.constant 544 : index
    %7 = vector.load %arg5[%c0_7, %c544] : memref<18x576xf32, #tpu.memory_space<vmem>>, vector<18x32xf32>
    tpu.vector_store %arg5[%c0_7, %c544], %6 {strides = array<i32>} : memref<18x576xf32, #tpu.memory_space<vmem>>, vector<18x32xf32>,
    %c0_8 = arith.constant 0 : index
    %c0_9 = arith.constant 0 : index
    %c0_10 = arith.constant 0 : index
    %8 = vector.load %arg1[%c0_8, %c0_9, %c0_10] : memref<1x16x512xf32, #tpu.memory_space<vmem>>, vector<1x16x512xf32>
    %9 = vector.shape_cast %8 : vector<1x16x512xf32> to vector<16x512xf32>
    %c1 = arith.constant 1 : index
    %c32 = arith.constant 32 : index
    %10 = vector.load %arg5[%c1, %c32] : memref<18x576xf32, #tpu.memory_space<vmem>>, vector<16x512xf32>
    tpu.vector_store %arg5[%c1, %c32], %9 {strides = array<i32>} : memref<18x576xf32, #tpu.memory_space<vmem>>, vector<16x512xf32>,
    %c0_11 = arith.constant 0 : index
    %c0_12 = arith.constant 0 : index
    %11 = vector.load %arg3[%c0_11, %c0_12] : memref<1x512xf32, #tpu.memory_space<vmem>>, vector<1x512xf32>
    %12 = vector.shape_cast %11 : vector<1x512xf32> to vector<512xf32>
    %13 = vector.shape_cast %12 : vector<512xf32> to vector<1x512xf32>
    %14 = vector.broadcast %13 : vector<1x512xf32> to vector<16x512xf32>
    %c0_13 = arith.constant 0 : index
    %c0_14 = arith.constant 0 : index
    %15 = vector.load %arg5[%c0_13, %c0_14] : memref<18x576xf32, #tpu.memory_space<vmem>>, vector<16x512xf32>
    %c0_15 = arith.constant 0 : index
    %c0_16 = arith.constant 0 : index
    %16 = vector.load %arg2[%c0_15, %c0_16] : memref<9x512xf32, #tpu.memory_space<vmem>>, vector<1x512xf32>
    %17 = vector.shape_cast %16 : vector<1x512xf32> to vector<512xf32>
    %18 = vector.shape_cast %17 : vector<512xf32> to vector<1x512xf32>
    %19 = vector.broadcast %18 : vector<1x512xf32> to vector<16x512xf32>
    %20 = arith.mulf %15, %19 : vector<16x512xf32>
    %21 = arith.addf %14, %20 : vector<16x512xf32>
    %c0_17 = arith.constant 0 : index
    %c32_18 = arith.constant 32 : index
    %22 = vector.load %arg5[%c0_17, %c32_18] : memref<18x576xf32, #tpu.memory_space<vmem>>, vector<16x512xf32>
    %c1_19 = arith.constant 1 : index
    %c0_20 = arith.constant 0 : index
    %23 = vector.load %arg2[%c1_19, %c0_20] : memref<9x512xf32, #tpu.memory_space<vmem>>, vector<1x512xf32>
    %24 = vector.shape_cast %23 : vector<1x512xf32> to vector<512xf32>
    %25 = vector.shape_cast %24 : vector<512xf32> to vector<1x512xf32>
    %26 = vector.broadcast %25 : vector<1x512xf32> to vector<16x512xf32>
    %27 = arith.mulf %22, %26 : vector<16x512xf32>
    %28 = arith.addf %21, %27 : vector<16x512xf32>
    %c0_21 = arith.constant 0 : index
    %c64 = arith.constant 64 : index
    %29 = vector.load %arg5[%c0_21, %c64] : memref<18x576xf32, #tpu.memory_space<vmem>>, vector<16x512xf32>
    %c2 = arith.constant 2 : index
    %c0_22 = arith.constant 0 : index
    %30 = vector.load %arg2[%c2, %c0_22] : memref<9x512xf32, #tpu.memory_space<vmem>>, vector<1x512xf32>
    %31 = vector.shape_cast %30 : vector<1x512xf32> to vector<512xf32>
    %32 = vector.shape_cast %31 : vector<512xf32> to vector<1x512xf32>
    %33 = vector.broadcast %32 : vector<1x512xf32> to vector<16x512xf32>
    %34 = arith.mulf %29, %33 : vector<16x512xf32>
    %35 = arith.addf %28, %34 : vector<16x512xf32>
    %c1_23 = arith.constant 1 : index
    %c0_24 = arith.constant 0 : index
    %36 = vector.load %arg5[%c1_23, %c0_24] : memref<18x576xf32, #tpu.memory_space<vmem>>, vector<16x512xf32>
    %c3 = arith.constant 3 : index
    %c0_25 = arith.constant 0 : index
    %37 = vector.load %arg2[%c3, %c0_25] : memref<9x512xf32, #tpu.memory_space<vmem>>, vector<1x512xf32>
    %38 = vector.shape_cast %37 : vector<1x512xf32> to vector<512xf32>
    %39 = vector.shape_cast %38 : vector<512xf32> to vector<1x512xf32>
    %40 = vector.broadcast %39 : vector<1x512xf32> to vector<16x512xf32>
    %41 = arith.mulf %36, %40 : vector<16x512xf32>
    %42 = arith.addf %35, %41 : vector<16x512xf32>
    %c1_26 = arith.constant 1 : index
    %c32_27 = arith.constant 32 : index
    %43 = vector.load %arg5[%c1_26, %c32_27] : memref<18x576xf32, #tpu.memory_space<vmem>>, vector<16x512xf32>
    %c4 = arith.constant 4 : index
    %c0_28 = arith.constant 0 : index
    %44 = vector.load %arg2[%c4, %c0_28] : memref<9x512xf32, #tpu.memory_space<vmem>>, vector<1x512xf32>
    %45 = vector.shape_cast %44 : vector<1x512xf32> to vector<512xf32>
    %46 = vector.shape_cast %45 : vector<512xf32> to vector<1x512xf32>
    %47 = vector.broadcast %46 : vector<1x512xf32> to vector<16x512xf32>
    %48 = arith.mulf %43, %47 : vector<16x512xf32>
    %49 = arith.addf %42, %48 : vector<16x512xf32>
    %c1_29 = arith.constant 1 : index
    %c64_30 = arith.constant 64 : index
    %50 = vector.load %arg5[%c1_29, %c64_30] : memref<18x576xf32, #tpu.memory_space<vmem>>, vector<16x512xf32>
    %c5 = arith.constant 5 : index
    %c0_31 = arith.constant 0 : index
    %51 = vector.load %arg2[%c5, %c0_31] : memref<9x512xf32, #tpu.memory_space<vmem>>, vector<1x512xf32>
    %52 = vector.shape_cast %51 : vector<1x512xf32> to vector<512xf32>
    %53 = vector.shape_cast %52 : vector<512xf32> to vector<1x512xf32>
    %54 = vector.broadcast %53 : vector<1x512xf32> to vector<16x512xf32>
    %55 = arith.mulf %50, %54 : vector<16x512xf32>
    %56 = arith.addf %49, %55 : vector<16x512xf32>
    %c2_32 = arith.constant 2 : index
    %c0_33 = arith.constant 0 : index
    %57 = vector.load %arg5[%c2_32, %c0_33] : memref<18x576xf32, #tpu.memory_space<vmem>>, vector<16x512xf32>
    %c6 = arith.constant 6 : index
    %c0_34 = arith.constant 0 : index
    %58 = vector.load %arg2[%c6, %c0_34] : memref<9x512xf32, #tpu.memory_space<vmem>>, vector<1x512xf32>
    %59 = vector.shape_cast %58 : vector<1x512xf32> to vector<512xf32>
    %60 = vector.shape_cast %59 : vector<512xf32> to vector<1x512xf32>
    %61 = vector.broadcast %60 : vector<1x512xf32> to vector<16x512xf32>
    %62 = arith.mulf %57, %61 : vector<16x512xf32>
    %63 = arith.addf %56, %62 : vector<16x512xf32>
    %c2_35 = arith.constant 2 : index
    %c32_36 = arith.constant 32 : index
    %64 = vector.load %arg5[%c2_35, %c32_36] : memref<18x576xf32, #tpu.memory_space<vmem>>, vector<16x512xf32>
    %c7 = arith.constant 7 : index
    %c0_37 = arith.constant 0 : index
    %65 = vector.load %arg2[%c7, %c0_37] : memref<9x512xf32, #tpu.memory_space<vmem>>, vector<1x512xf32>
    %66 = vector.shape_cast %65 : vector<1x512xf32> to vector<512xf32>
    %67 = vector.shape_cast %66 : vector<512xf32> to vector<1x512xf32>
    %68 = vector.broadcast %67 : vector<1x512xf32> to vector<16x512xf32>
    %69 = arith.mulf %64, %68 : vector<16x512xf32>
    %70 = arith.addf %63, %69 : vector<16x512xf32>
    %c2_38 = arith.constant 2 : index
    %c64_39 = arith.constant 64 : index
    %71 = vector.load %arg5[%c2_38, %c64_39] : memref<18x576xf32, #tpu.memory_space<vmem>>, vector<16x512xf32>
    %c8 = arith.constant 8 : index
    %c0_40 = arith.constant 0 : index
    %72 = vector.load %arg2[%c8, %c0_40] : memref<9x512xf32, #tpu.memory_space<vmem>>, vector<1x512xf32>
    %73 = vector.shape_cast %72 : vector<1x512xf32> to vector<512xf32>
    %74 = vector.shape_cast %73 : vector<512xf32> to vector<1x512xf32>
    %75 = vector.broadcast %74 : vector<1x512xf32> to vector<16x512xf32>
    %76 = arith.mulf %71, %75 : vector<16x512xf32>
    %77 = arith.addf %70, %76 : vector<16x512xf32>
    %78 = arith.negf %77 : vector<16x512xf32>
    %79 = math.exp %78 : vector<16x512xf32>
    %cst_41 = arith.constant 1.000000e+00 : f32
    %80 = vector.broadcast %cst_41 : f32 to vector<16x512xf32>
    %81 = arith.addf %80, %79 : vector<16x512xf32>
    %82 = arith.divf %80, %81 : vector<16x512xf32>
    %c0_42 = arith.constant 0 : index
    %c0_43 = arith.constant 0 : index
    %c0_44 = arith.constant 0 : index
    %83 = vector.load %arg1[%c0_42, %c0_43, %c0_44] : memref<1x16x512xf32, #tpu.memory_space<vmem>>, vector<1x16x512xf32>
    %84 = vector.shape_cast %83 : vector<1x16x512xf32> to vector<16x512xf32>
    %85 = arith.mulf %84, %82 : vector<16x512xf32>
    %c0_45 = arith.constant 0 : index
    %c0_46 = arith.constant 0 : index
    %c0_47 = arith.constant 0 : index
    %86 = vector.load %arg4[%c0_45, %c0_46, %c0_47] : memref<1x16x512xf32, #tpu.memory_space<vmem>>, vector<1x16x512xf32>
    %87 = vector.shape_cast %86 : vector<1x16x512xf32> to vector<16x512xf32>
    %88 = vector.shape_cast %85 : vector<16x512xf32> to vector<1x16x512xf32>
    tpu.vector_store %arg4[%c0_45, %c0_46, %c0_47], %88 {strides = array<i32>} : memref<1x16x512xf32, #tpu.memory_space<vmem>>, vector<1x16x512xf32>,
    return
  }
  func.func @transform_0(%arg0: i32) -> (i32, i32, i32) {
    %c0_i32 = arith.constant 0 : i32
    %c0_i32_0 = arith.constant 0 : i32
    %c0_i32_1 = arith.constant 0 : i32
    return %arg0, %c0_i32, %c0_i32_0 : i32, i32, i32
  }
  func.func @transform_1(%arg0: i32) -> (i32, i32) {
    %c0_i32 = arith.constant 0 : i32
    %c0_i32_0 = arith.constant 0 : i32
    %c0_i32_1 = arith.constant 0 : i32
    return %c0_i32, %c0_i32_0 : i32, i32
  }
  func.func @transform_2(%arg0: i32) -> (i32, i32) {
    %c0_i32 = arith.constant 0 : i32
    %c0_i32_0 = arith.constant 0 : i32
    %c0_i32_1 = arith.constant 0 : i32
    return %c0_i32, %c0_i32_0 : i32, i32
  }
  func.func @transform_3(%arg0: i32) -> (i32, i32, i32) {
    %c0_i32 = arith.constant 0 : i32
    %c0_i32_0 = arith.constant 0 : i32
    %c0_i32_1 = arith.constant 0 : i32
    return %arg0, %c0_i32, %c0_i32_0 : i32, i32, i32
  }
}

</mosaic_0001>

<llo_original>
// kernel: tpu_custom_call.1
$region0: #{tpu_custom_call.1}
  #allocation0 [shape = 'u32[]', space=smem, size = 0x4, offset = 0x4, fixed_abs, tag = 'smem constant byte address 0x4 - core index']
  #allocation1 [shape = 'u32[144,128]{1,0:T(1,128)}', space=vmem, size = 0x12000, scoped, tag = 'internal scratch']
  #allocation2 [shape = 'f32[18,576]{1,0:T(8,128)}', space=vmem, size = 0xf000, scoped, tag = 'scratch operand']
  %s0 = inlined_call_operand.hbm [shape: f32[2,16,512], index: 0, kind: input, shape index: {}]
  %s1 = inlined_call_operand.hbm [shape: f32[9,512], index: 1, kind: input, shape index: {}]
  %s2 = inlined_call_operand.vmem [shape: f32[1,512], index: 2, kind: input, shape index: {}]
  %s3 = inlined_call_operand.hbm [shape: f32[2,16,512], index: 3, kind: output, shape index: {}]
  %s4 = sld [smem:[#allocation0]]
  $region53: #{tpu_custom_call.1} parent=0
    _
  %s6 = ssub.s32 1, %s4
  %s7 = scalar_select 0, %s6, %s4
  $region1: #{tpu_custom_call.1} parent=0
    #allocation3 [shape = 'u8[65536]{0}', space=vmem, size = 0x10000, scoped, tag = 'input window, operand 0']
    #allocation4 [shape = 's32[2]{0}', space=sflag, size = 0x8, scoped, tag = 'scoped memory for tpu_custom_call.1']
    #allocation5 [shape = 's32[2]{0}', space=sflag, size = 0x8, scoped, tag = 'scoped memory for tpu_custom_call.1']
    #allocation6 [shape = 'u8[32768]{0}', space=vmem, size = 0x8000, scoped, tag = 'input window, operand 1, single buffered']
    #allocation7 [shape = 's32[1]{0}', space=sflag, size = 0x4, scoped, tag = 'scoped memory for tpu_custom_call.1']
    #allocation8 [shape = 'u8[65536]{0}', space=vmem, size = 0x10000, scoped, tag = 'output window, operand 0']
    %8 = vsyncpa [#allocation4], 0
    %s9 = scalar_lea.sflag [#allocation4], 1
    %10 = vsyncpa %s9, 0
    %11 = vsyncpa [#allocation7], 0
    %12 = vsyncpa [#allocation5], 0
    %s13 = scalar_lea.sflag [#allocation5], 1
    %14 = vsyncpa %s13, 0
    loop: start=0, step=1, limit=4
    $region2: #{tpu_custom_call.1} parent=1 // loop_pre_header
      _
    $region3: #{tpu_custom_call.1} parent=1 // loop_header
      %s16 = sphi 0, %s20
      %p17 = scmp.ge.s32.totalorder %s16, 4
      %s26 = sphi 0, %s28
      %s29 = sphi 0, %s26
      %s30 = sphi 0, %s29
      %s46 = sphi 0, %s30
      %s50 = sphi 0, %s50
      %s52 = sphi 0, %s50
      %s53 = sphi 0, %s52
      %s67 = sphi 0, %s53
      %s71 = sphi 0, %s71
      %s73 = sphi 0, %s71
      %s74 = sphi 0, %s73
      %s88 = sphi 0, %s74
      %s94 = sphi 0, %s96
      %s97 = sphi 0, %s94
      %s98 = sphi 0, %s97
      %s114 = sphi 0, %s98
    $region4: #{tpu_custom_call.1} parent=1 // loop_header_branch
      %19 = sbr.rel (%p17) target = $region8
    $region5: #{tpu_custom_call.1} parent=1 // loop_body
      %s21 = ssub.s32 %s16, 1
      %s22 = ssub.s32 %s16, 2
      %s23 = sadd.s32 %s16, 1
      %s24 = ssub.s32 %s16, %s23
      %p25 = scmp.eq.s32.totalorder %s24, 0
      %s27 = sadd.s32 %s26, 1
      %s28 = scalar_select %p25, %s26, %s27
      %p31 = pneg %p25
      %p32 = scmp.eq.s32.totalorder %s16, 1
      %p33 = por %p31, %p32
      %p34 = scmp.ne.s32.totalorder %s26, %s29
      %p35 = scmp.eq.s32.totalorder %s16, 0
      %p36 = por %p34, %p35
      %p37 = scmp.ne.s32.totalorder %s26, %s29
      %p38 = scmp.eq.s32.totalorder %s21, 1
      %p39 = por %p37, %p38
      %p40 = scmp.ne.s32.totalorder %s29, %s30
      %p41 = scmp.eq.s32.totalorder %s21, 0
      %p42 = por %p40, %p41
      %p43 = scmp.ne.s32.totalorder %s29, %s30
      %p44 = scmp.eq.s32.totalorder %s22, 1
      %p45 = por %p43, %p44
      %p47 = scmp.ne.s32.totalorder %s30, %s46
      %p48 = scmp.eq.s32.totalorder %s22, 0
      %p49 = por %p47, %p48
      %s51 = sadd.s32 %s50, 1
      %p54 = scmp.eq.s32.totalorder %s16, 1
      %p55 = scmp.ne.s32.totalorder %s50, %s52
      %p56 = scmp.eq.s32.totalorder %s16, 0
      %p57 = por %p55, %p56
      %p58 = scmp.ne.s32.totalorder %s50, %s52
      %p59 = scmp.eq.s32.totalorder %s21, 1
      %p60 = por %p58, %p59
      %p61 = scmp.ne.s32.totalorder %s52, %s53
      %p62 = scmp.eq.s32.totalorder %s21, 0
      %p63 = por %p61, %p62
      %p64 = scmp.ne.s32.totalorder %s52, %s53
      %p65 = scmp.eq.s32.totalorder %s22, 1
      %p66 = por %p64, %p65
      %p68 = scmp.ne.s32.totalorder %s53, %s67
      %p69 = scmp.eq.s32.totalorder %s22, 0
      %p70 = por %p68, %p69
      %s72 = sadd.s32 %s71, 1
      %p75 = scmp.eq.s32.totalorder %s16, 1
      %p76 = scmp.ne.s32.totalorder %s71, %s73
      %p77 = scmp.eq.s32.totalorder %s16, 0
      %p78 = por %p76, %p77
      %p79 = scmp.ne.s32.totalorder %s71, %s73
      %p80 = scmp.eq.s32.totalorder %s21, 1
      %p81 = por %p79, %p80
      %p82 = scmp.ne.s32.totalorder %s73, %s74
      %p83 = scmp.eq.s32.totalorder %s21, 0
      %p84 = por %p82, %p83
      %p85 = scmp.ne.s32.totalorder %s73, %s74
      %p86 = scmp.eq.s32.totalorder %s22, 1
      %p87 = por %p85, %p86
      %p89 = scmp.ne.s32.totalorder %s74, %s88
      %p90 = scmp.eq.s32.totalorder %s22, 0
      %p91 = por %p89, %p90
      %s92 = ssub.s32 %s16, %s23
      %p93 = scmp.eq.s32.totalorder %s92, 0
      %s95 = sadd.s32 %s94, 1
      %s96 = scalar_select %p93, %s94, %s95
      %p99 = pneg %p93
      %p100 = scmp.eq.s32.totalorder %s16, 1
      %p101 = por %p99, %p100
      %p102 = scmp.ne.s32.totalorder %s94, %s97
      %p103 = scmp.eq.s32.totalorder %s16, 0
      %p104 = por %p102, %p103
      %p105 = scmp.ne.s32.totalorder %s94, %s97
      %p106 = scmp.eq.s32.totalorder %s21, 1
      %p107 = por %p105, %p106
      %p108 = scmp.ne.s32.totalorder %s97, %s98
      %p109 = scmp.eq.s32.totalorder %s21, 0
      %p110 = por %p108, %p109
      %p111 = scmp.ne.s32.totalorder %s97, %s98
      %p112 = scmp.eq.s32.totalorder %s22, 1
      %p113 = por %p111, %p112
      %p115 = scmp.ne.s32.totalorder %s98, %s114
      %p116 = scmp.eq.s32.totalorder %s22, 0
      %p117 = por %p115, %p116
      %p118 = scmp.le.s32.totalorder 1, %s16
      %p119 = scmp.lt.s32.totalorder %s16, 3
      %p120 = pnand %p118, %p119
      %p121 = pneg %p120
      // Predicated region
      $region9: #{tpu_custom_call.1} parent=5 // pred_check
        _
      $region10: #{tpu_custom_call.1} parent=5 // pred_check_branch
        %123 = sbr.rel (%p120) target = $region12
      $region11: #{tpu_custom_call.1} parent=5 // pred_region
        %s124 = ssub.s32 %s16, 1
        // Predicated region
        $region13: #{tpu_custom_call.1} parent=11 // pred_check
          %p125 = pneg %p63
        $region14: #{tpu_custom_call.1} parent=11 // pred_check_branch
          %127 = sbr.rel (%p125) target = $region16
        $region15: #{tpu_custom_call.1} parent=11 // pred_region
          %s129 = ssub.s32 1024, 1024
          %130 = vsyncadd [#allocation7], %s129
          %s131 = sshll.u32 [#allocation6], 4
          %s132 = int_to_ptr.vmem [resolvable:$true] %s131
          %137 = dma.hbm_to_vmem [thread:$0]  %s1, 1024, %s132, [#allocation7], 512, 512, 32
        $region16: #{tpu_custom_call.1} parent=11 // pred_fallthru
          _
        // Predicated region
        $region17: #{tpu_custom_call.1} parent=11 // pred_check
          %p138 = pneg %p84
        $region18: #{tpu_custom_call.1} parent=11 // pred_check_branch
          %140 = sbr.rel (%p138) target = $region20
        $region19: #{tpu_custom_call.1} parent=11 // pred_region
          _
        $region20: #{tpu_custom_call.1} parent=11 // pred_fallthru
          _
      $region12: #{tpu_custom_call.1} parent=5 // pred_fallthru
        _
      %p141 = scmp.lt.s32.totalorder %s16, 2
      // Predicated region
      $region21: #{tpu_custom_call.1} parent=5 // pred_check
        %p142 = pneg %p141
      $region22: #{tpu_custom_call.1} parent=5 // pred_check_branch
        %144 = sbr.rel (%p142) target = $region24
      $region23: #{tpu_custom_call.1} parent=5 // pred_region
        // Predicated region
        $region25: #{tpu_custom_call.1} parent=23 // pred_check
          %p145 = pneg %p36
        $region26: #{tpu_custom_call.1} parent=23 // pred_check_branch
          %147 = sbr.rel (%p145) target = $region28
        $region27: #{tpu_custom_call.1} parent=23 // pred_region
          %s148 = sand.u32 %s26, 1
          %s149 = scalar_lea.sflag [#allocation4], %s148
          %s150 = sand.u32 %s26, 1
          %s151 = smul.addr %s150, 64
          %s152 = scalar_lea.vmem [#allocation3], %s151
          %s154 = ssub.s32 1024, 1024
          %155 = vsyncadd %s149, %s154
          %s156 = smul.addr %s16, 8
          %s157 = smul.addr %s156, 128
          %s158 = scalar_lea.hbm %s0, %s157
          %s159 = sshll.u32 %s152, 4
          %s160 = int_to_ptr.vmem [resolvable:$true] %s159
          %165 = dma.hbm_to_vmem [thread:$0]  %s158, 1024, %s160, %s149, 512, 512, 32
        $region28: #{tpu_custom_call.1} parent=23 // pred_fallthru
          _
      $region24: #{tpu_custom_call.1} parent=5 // pred_fallthru
        _
      %p166 = scmp.le.s32.totalorder 1, %s16
      %p167 = scmp.lt.s32.totalorder %s16, 3
      %p168 = pnand %p166, %p167
      %p169 = pneg %p168
      // Predicated region
      $region29: #{tpu_custom_call.1} parent=5 // pred_check
        _
      $region30: #{tpu_custom_call.1} parent=5 // pred_check_branch
        %171 = sbr.rel (%p168) target = $region32
      $region31: #{tpu_custom_call.1} parent=5 // pred_region
        %s172 = ssub.s32 %s16, 1
        %s173 = sand.u32 %s29, 1
        %s174 = scalar_lea.sflag [#allocation4], %s173
        %s175 = sand.u32 %s29, 1
        %s176 = smul.addr %s175, 64
        %s177 = scalar_lea.vmem [#allocation3], %s176
        // Predicated region
        $region33: #{tpu_custom_call.1} parent=31 // pred_check
          %p178 = pneg %p42
        $region34: #{tpu_custom_call.1} parent=31 // pred_check_branch
          %180 = sbr.rel (%p178) target = $region36
        $region35: #{tpu_custom_call.1} parent=31 // pred_region
          %181 = dma.done %s174, 1024
        $region36: #{tpu_custom_call.1} parent=31 // pred_fallthru
          _
        // Predicated region
        $region37: #{tpu_custom_call.1} parent=31 // pred_check
          %p182 = pneg %p63
        $region38: #{tpu_custom_call.1} parent=31 // pred_check_branch
          %184 = sbr.rel (%p182) target = $region40
        $region39: #{tpu_custom_call.1} parent=31 // pred_region
          %185 = dma.done [#allocation7], 1024
        $region40: #{tpu_custom_call.1} parent=31 // pred_fallthru
          _
        %s186 = sand.u32 %s29, 1
        %s187 = scalar_lea.sflag [#allocation4], %s186
        %s188 = sand.u32 %s29, 1
        %s189 = smul.addr %s188, 64
        %s190 = scalar_lea.vmem [#allocation3], %s189
        %p191 = pneg %p42
        %p192 = pneg %p39
        %p193 = pneg %p63
        %p194 = pneg %p60
        %p195 = pneg %p84
        %p196 = pneg %p81
        %p197 = pneg %p110
        %p198 = pneg %p107
        %s199 = sand.u32 %s97, 1
        %s200 = scalar_lea.sflag [#allocation5], %s199
        %s201 = sand.u32 %s97, 1
        %s202 = smul.addr %s201, 64
        %s203 = scalar_lea.vmem [#allocation8], %s202
        %v204 = vlaneseq
        %vm205 = vcmp.ge.s32.totalorder %v204, 0
        %vm206 = vcmp.lt.s32.totalorder %v204, 576
        %vm207 = vmand %vm205, %vm206
        %208 = vst.msk [vmem:[#allocation2] ss:$8 sm:$0xf] %vm207, 0.0
        %209 = vst.msk [vmem:[#allocation2] ss:$8 sm:$0x10] %vm207, 0.0
        %s210 = scalar_lea.vmem [#allocation2], 81
        %211 = vst.msk [vmem:[%s210] ss:$8 sm:$0xf] %vm207, 0.0
        %212 = vst.msk [vmem:[%s210] ss:$8 sm:$0x10] %vm207, 0.0
        %vm213 = vcmask 261120
        %214 = vst.msk [vmem:[#allocation2] sm:$0xff] %vm213, 0.0
        %215 = vst.msk [vmem:[#allocation2 + $0x28] sm:$0xff] %vm213, 0.0
        %vm216 = vcmask 254976
        %217 = vst.msk [vmem:[#allocation2 + $0x50] sm:$0x3] %vm216, 0.0
        %vm218 = vcmask 523520
        %219 = vst.msk [vmem:[#allocation2 + $0x20] sm:$0xff] %vm218, 0.0
        %220 = vst.msk [vmem:[#allocation2 + $0x48] sm:$0xff] %vm218, 0.0
        %vm221 = vcmask 517376
        %222 = vst.msk [vmem:[#allocation2 + $0x70] sm:$0x3] %vm221, 0.0
        %v223 = vld [vmem:[%s177] sm:$0xff]
        %v224 = vld [vmem:[%s177 + $0x8] sm:$0xff]
        %v225 = vld [vmem:[%s177 + $0x10] sm:$0xff]
        %v226 = vld [vmem:[%s177 + $0x18] sm:$0xff]
        %v227 = vld [vmem:[%s177 + $0x20] sm:$0xff]
        %v228 = vld [vmem:[%s177 + $0x28] sm:$0xff]
        %v229 = vld [vmem:[%s177 + $0x30] sm:$0xff]
        %v230 = vld [vmem:[%s177 + $0x38] sm:$0xff]
        %vm239 = vcmask 1040384
        %v240 = vrot.slane %v223, 7
        %v241 = vrot.slane %v224, 7
        %v242 = vrot.slane %v225, 7
        %v243 = vrot.slane %v226, 7
        %v244 = vrot.slane %v227, 7
        %v245 = vsel %vm239, %v240, %v244
        %v246 = vrot.slane %v228, 7
        %v247 = vsel %vm239, %v241, %v246
        %v248 = vrot.slane %v229, 7
        %v249 = vsel %vm239, %v242, %v248
        %v250 = vrot.slane %v230, 7
        %v251 = vsel %vm239, %v243, %v250
        %252 = vrot.lane.b32.xlu0 %v240, 32
        %v253 = vpop.permute.xlu0 %252
        %254 = vrot.lane.b32.xlu0 %v241, 32
        %v255 = vpop.permute.xlu0 %254
        %256 = vrot.lane.b32.xlu0 %v242, 32
        %v257 = vpop.permute.xlu0 %256
        %258 = vrot.lane.b32.xlu0 %v243, 32
        %v259 = vpop.permute.xlu0 %258
        %260 = vrot.lane.b32.xlu0 %v245, 32
        %v261 = vpop.permute.xlu0 %260
        %262 = vrot.lane.b32.xlu0 %v247, 32
        %v263 = vpop.permute.xlu0 %262
        %264 = vrot.lane.b32.xlu0 %v249, 32
        %v265 = vpop.permute.xlu0 %264
        %266 = vrot.lane.b32.xlu0 %v251, 32
        %v267 = vpop.permute.xlu0 %266
        %268 = vrot.lane.b32.xlu0 %v244, 32
        %v269 = vpop.permute.xlu0 %268
        %270 = vrot.lane.b32.xlu0 %v246, 32
        %v271 = vpop.permute.xlu0 %270
        %272 = vrot.lane.b32.xlu0 %v248, 32
        %v273 = vpop.permute.xlu0 %272
        %274 = vrot.lane.b32.xlu0 %v250, 32
        %v275 = vpop.permute.xlu0 %274
        %v276 = vsel %vm213, %v253, %v255
        %v277 = vsel %vm213, %v255, %v257
        %v278 = vsel %vm213, %v257, %v259
        %v279 = vsel %vm213, %v261, %v263
        %v280 = vsel %vm213, %v263, %v265
        %v281 = vsel %vm213, %v265, %v267
        %v282 = vsel %vm213, %v269, %v271
        %v283 = vsel %vm213, %v271, %v273
        %v284 = vsel %vm213, %v273, %v275
        %vm300 = vcmask 1047809
        %301 = vst.msk [vmem:[#allocation2] sm:$0xfe] %vm300, %v253
        %302 = vst [vmem:[#allocation2 + $0x8] sm:$0xfe] %v276
        %303 = vst [vmem:[#allocation2 + $0x10] sm:$0xfe] %v277
        %304 = vst [vmem:[#allocation2 + $0x18] sm:$0xfe] %v278
        %vm305 = vcmask 261121
        %306 = vst.msk [vmem:[#allocation2 + $0x20] sm:$0xfe] %vm305, %v259
        %vm307 = vcmask 1047808
        %308 = vst.msk [vmem:[#allocation2 + $0x28] sm:$0xff] %vm307, %v261
        %309 = vst [vmem:[#allocation2 + $0x30] sm:$0xff] %v279
        %310 = vst [vmem:[#allocation2 + $0x38] sm:$0xff] %v280
        %311 = vst [vmem:[#allocation2 + $0x40] sm:$0xff] %v281
        %312 = vst.msk [vmem:[#allocation2 + $0x48] sm:$0xff] %vm213, %v267
        %vm313 = vcmask 1040640
        %314 = vst.msk [vmem:[#allocation2 + $0x50] sm:$0x1] %vm313, %v269
        %315 = vst [vmem:[#allocation2 + $0x58] sm:$0x1] %v282
        %316 = vst [vmem:[#allocation2 + $0x60] sm:$0x1] %v283
        %317 = vst [vmem:[#allocation2 + $0x68] sm:$0x1] %v284
        %vm318 = vcmask 253952
        %319 = vst.msk [vmem:[#allocation2 + $0x70] sm:$0x1] %vm318, %v275
        %v320 = vld [vmem:[%s2] sm:$0xf]
        %v322 = vlaneseq
        %v323 = vshrl.u32 %v322, 7
        %v324 = vsub.s32 0, %v323
        %v325 = vrot.slane %v320, %v324
        %v326 = vlaneseq
        %v327 = vshrl.u32 %v326, 7
        %v328 = vsub.s32 1, %v327
        %v329 = vrot.slane %v320, %v328
        %v330 = vlaneseq
        %v331 = vshrl.u32 %v330, 7
        %v332 = vsub.s32 2, %v331
        %v333 = vrot.slane %v320, %v332
        %v334 = vlaneseq
        %v335 = vshrl.u32 %v334, 7
        %v336 = vsub.s32 3, %v335
        %v337 = vrot.slane %v320, %v336
        %v342 = vld [vmem:[#allocation2] sm:$0xff]
        %v343 = vld [vmem:[#allocation2 + $0x8] sm:$0xff]
        %v344 = vld [vmem:[#allocation2 + $0x10] sm:$0xff]
        %v345 = vld [vmem:[#allocation2 + $0x18] sm:$0xff]
        %v346 = vld [vmem:[#allocation2 + $0x28] sm:$0xff]
        %v347 = vld [vmem:[#allocation2 + $0x30] sm:$0xff]
        %v348 = vld [vmem:[#allocation2 + $0x38] sm:$0xff]
        %v349 = vld [vmem:[#allocation2 + $0x40] sm:$0xff]
        %v350 = vld [vmem:[#allocation6] ss:$8 sm:$0xf]
        %v352 = vlaneseq
        %v353 = vshrl.u32 %v352, 7
        %v354 = vsub.s32 0, %v353
        %v355 = vrot.slane %v350, %v354
        %v356 = vlaneseq
        %v357 = vshrl.u32 %v356, 7
        %v358 = vsub.s32 1, %v357
        %v359 = vrot.slane %v350, %v358
        %v360 = vlaneseq
        %v361 = vshrl.u32 %v360, 7
        %v362 = vsub.s32 2, %v361
        %v363 = vrot.slane %v350, %v362
        %v364 = vlaneseq
        %v365 = vshrl.u32 %v364, 7
        %v366 = vsub.s32 3, %v365
        %v367 = vrot.slane %v350, %v366
        %v372 = vmul.f32 %v342, %v355
        %v373 = vmul.f32 %v343, %v359
        %v374 = vmul.f32 %v344, %v363
        %v375 = vmul.f32 %v345, %v367
        %v376 = vmul.f32 %v346, %v355
        %v377 = vmul.f32 %v347, %v359
        %v378 = vmul.f32 %v348, %v363
        %v379 = vmul.f32 %v349, %v367
        %v380 = vadd.f32 %v325, %v372
        %v381 = vadd.f32 %v329, %v373
        %v382 = vadd.f32 %v333, %v374
        %v383 = vadd.f32 %v337, %v375
        %v384 = vadd.f32 %v325, %v376
        %v385 = vadd.f32 %v329, %v377
        %v386 = vadd.f32 %v333, %v378
        %v387 = vadd.f32 %v337, %v379
        %v388 = vld [vmem:[#allocation2 + $0x20] sm:$0xff]
        %v389 = vld [vmem:[#allocation2 + $0x48] sm:$0xff]
        %s390 = scalar_lea.vmem [#allocation6], 1
        %v391 = vld [vmem:[%s390] ss:$8 sm:$0xf]
        %v393 = vlaneseq
        %v394 = vshrl.u32 %v393, 7
        %v395 = vsub.s32 0, %v394
        %v396 = vrot.slane %v391, %v395
        %v397 = vlaneseq
        %v398 = vshrl.u32 %v397, 7
        %v399 = vsub.s32 1, %v398
        %v400 = vrot.slane %v391, %v399
        %v401 = vlaneseq
        %v402 = vshrl.u32 %v401, 7
        %v403 = vsub.s32 2, %v402
        %v404 = vrot.slane %v391, %v403
        %v405 = vlaneseq
        %v406 = vshrl.u32 %v405, 7
        %v407 = vsub.s32 3, %v406
        %v408 = vrot.slane %v391, %v407
        %409 = vrot.lane.b32.xlu0 %v396, 32
        %v410 = vpop.permute.xlu0 %409
        %411 = vrot.lane.b32.xlu0 %v400, 32
        %v412 = vpop.permute.xlu0 %411
        %413 = vrot.lane.b32.xlu0 %v404, 32
        %v414 = vpop.permute.xlu0 %413
        %415 = vrot.lane.b32.xlu0 %v408, 32
        %v416 = vpop.permute.xlu0 %415
        %v417 = vsel %vm213, %v410, %v412
        %v418 = vsel %vm213, %v412, %v414
        %v419 = vsel %vm213, %v414, %v416
        %v425 = vmul.f32 %v342, %v410
        %v426 = vmul.f32 %v343, %v417
        %v427 = vmul.f32 %v344, %v418
        %v428 = vmul.f32 %v345, %v419
        %v429 = vmul.f32 %v388, %v416
        %v430 = vmul.f32 %v346, %v410
        %v431 = vmul.f32 %v347, %v417
        %v432 = vmul.f32 %v348, %v418
        %v433 = vmul.f32 %v349, %v419
        %v434 = vmul.f32 %v389, %v416
        %445 = vrot.lane.b32.xlu0 %v425, 96
        %v446 = vpop.permute.xlu0 %445
        %447 = vrot.lane.b32.xlu0 %v426, 96
        %v448 = vpop.permute.xlu0 %447
        %449 = vrot.lane.b32.xlu0 %v427, 96
        %v450 = vpop.permute.xlu0 %449
        %451 = vrot.lane.b32.xlu0 %v428, 96
        %v452 = vpop.permute.xlu0 %451
        %453 = vrot.lane.b32.xlu0 %v429, 96
        %v454 = vpop.permute.xlu0 %453
        %455 = vrot.lane.b32.xlu0 %v430, 96
        %v456 = vpop.permute.xlu0 %455
        %457 = vrot.lane.b32.xlu0 %v431, 96
        %v458 = vpop.permute.xlu0 %457
        %459 = vrot.lane.b32.xlu0 %v432, 96
        %v460 = vpop.permute.xlu0 %459
        %461 = vrot.lane.b32.xlu0 %v433, 96
        %v462 = vpop.permute.xlu0 %461
        %463 = vrot.lane.b32.xlu0 %v434, 96
        %v464 = vpop.permute.xlu0 %463
        %vm465 = vcmask 785408
        %v466 = vsel %vm465, %v446, %v448
        %v467 = vsel %vm465, %v448, %v450
        %v468 = vsel %vm465, %v450, %v452
        %v469 = vsel %vm465, %v452, %v454
        %v470 = vsel %vm465, %v456, %v458
        %v471 = vsel %vm465, %v458, %v460
        %v472 = vsel %vm465, %v460, %v462
        %v473 = vsel %vm465, %v462, %v464
        %v482 = vadd.f32 %v380, %v466
        %v483 = vadd.f32 %v381, %v467
        %v484 = vadd.f32 %v382, %v468
        %v485 = vadd.f32 %v383, %v469
        %v486 = vadd.f32 %v384, %v470
        %v487 = vadd.f32 %v385, %v471
        %v488 = vadd.f32 %v386, %v472
        %v489 = vadd.f32 %v387, %v473
        %s490 = scalar_lea.vmem [#allocation6], 2
        %v491 = vld [vmem:[%s490] ss:$8 sm:$0xf]
        %v493 = vlaneseq
        %v494 = vshrl.u32 %v493, 7
        %v495 = vsub.s32 0, %v494
        %v496 = vrot.slane %v491, %v495
        %v497 = vlaneseq
        %v498 = vshrl.u32 %v497, 7
        %v499 = vsub.s32 1, %v498
        %v500 = vrot.slane %v491, %v499
        %v501 = vlaneseq
        %v502 = vshrl.u32 %v501, 7
        %v503 = vsub.s32 2, %v502
        %v504 = vrot.slane %v491, %v503
        %v505 = vlaneseq
        %v506 = vshrl.u32 %v505, 7
        %v507 = vsub.s32 3, %v506
        %v508 = vrot.slane %v491, %v507
        %509 = vrot.lane.b32.xlu0 %v496, 64
        %v510 = vpop.permute.xlu0 %509
        %511 = vrot.lane.b32.xlu0 %v500, 64
        %v512 = vpop.permute.xlu0 %511
        %513 = vrot.lane.b32.xlu0 %v504, 64
        %v514 = vpop.permute.xlu0 %513
        %515 = vrot.lane.b32.xlu0 %v508, 64
        %v516 = vpop.permute.xlu0 %515
        %vm517 = vcmask 523264
        %v518 = vsel %vm517, %v510, %v512
        %v519 = vsel %vm517, %v512, %v514
        %v520 = vsel %vm517, %v514, %v516
        %v526 = vmul.f32 %v342, %v510
        %v527 = vmul.f32 %v343, %v518
        %v528 = vmul.f32 %v344, %v519
        %v529 = vmul.f32 %v345, %v520
        %v530 = vmul.f32 %v388, %v516
        %v531 = vmul.f32 %v346, %v510
        %v532 = vmul.f32 %v347, %v518
        %v533 = vmul.f32 %v348, %v519
        %v534 = vmul.f32 %v349, %v520
        %v535 = vmul.f32 %v389, %v516
        %546 = vrot.lane.b32.xlu0 %v526, 64
        %v547 = vpop.permute.xlu0 %546
        %548 = vrot.lane.b32.xlu0 %v527, 64
        %v549 = vpop.permute.xlu0 %548
        %550 = vrot.lane.b32.xlu0 %v528, 64
        %v551 = vpop.permute.xlu0 %550
        %552 = vrot.lane.b32.xlu0 %v529, 64
        %v553 = vpop.permute.xlu0 %552
        %554 = vrot.lane.b32.xlu0 %v530, 64
        %v555 = vpop.permute.xlu0 %554
        %556 = vrot.lane.b32.xlu0 %v531, 64
        %v557 = vpop.permute.xlu0 %556
        %558 = vrot.lane.b32.xlu0 %v532, 64
        %v559 = vpop.permute.xlu0 %558
        %560 = vrot.lane.b32.xlu0 %v533, 64
        %v561 = vpop.permute.xlu0 %560
        %562 = vrot.lane.b32.xlu0 %v534, 64
        %v563 = vpop.permute.xlu0 %562
        %564 = vrot.lane.b32.xlu0 %v535, 64
        %v565 = vpop.permute.xlu0 %564
        %v566 = vsel %vm517, %v547, %v549
        %v567 = vsel %vm517, %v549, %v551
        %v568 = vsel %vm517, %v551, %v553
        %v569 = vsel %vm517, %v553, %v555
        %v570 = vsel %vm517, %v557, %v559
        %v571 = vsel %vm517, %v559, %v561
        %v572 = vsel %vm517, %v561, %v563
        %v573 = vsel %vm517, %v563, %v565
        %v582 = vadd.f32 %v482, %v566
        %v583 = vadd.f32 %v483, %v567
        %v584 = vadd.f32 %v484, %v568
        %v585 = vadd.f32 %v485, %v569
        %v586 = vadd.f32 %v486, %v570
        %v587 = vadd.f32 %v487, %v571
        %v588 = vadd.f32 %v488, %v572
        %v589 = vadd.f32 %v489, %v573
        %v590 = vld [vmem:[#allocation2] sm:$0xfe]
        %v591 = vld [vmem:[#allocation2 + $0x8] sm:$0xfe]
        %v592 = vld [vmem:[#allocation2 + $0x10] sm:$0xfe]
        %v593 = vld [vmem:[#allocation2 + $0x18] sm:$0xfe]
        %v594 = vld [vmem:[#allocation2 + $0x50] sm:$0x1]
        %v595 = vld [vmem:[#allocation2 + $0x58] sm:$0x1]
        %v596 = vld [vmem:[#allocation2 + $0x60] sm:$0x1]
        %v597 = vld [vmem:[#allocation2 + $0x68] sm:$0x1]
        %s598 = scalar_lea.vmem [#allocation6], 3
        %v599 = vld [vmem:[%s598] ss:$8 sm:$0xf]
        %v601 = vlaneseq
        %v602 = vshrl.u32 %v601, 7
        %v603 = vsub.s32 0, %v602
        %v604 = vrot.slane %v599, %v603
        %v605 = vlaneseq
        %v606 = vshrl.u32 %v605, 7
        %v607 = vsub.s32 1, %v606
        %v608 = vrot.slane %v599, %v607
        %v609 = vlaneseq
        %v610 = vshrl.u32 %v609, 7
        %v611 = vsub.s32 2, %v610
        %v612 = vrot.slane %v599, %v611
        %v613 = vlaneseq
        %v614 = vshrl.u32 %v613, 7
        %v615 = vsub.s32 3, %v614
        %v616 = vrot.slane %v599, %v615
        %v621 = vmul.f32 %v590, %v604
        %v622 = vmul.f32 %v591, %v608
        %v623 = vmul.f32 %v592, %v612
        %v624 = vmul.f32 %v593, %v616
        %v625 = vmul.f32 %v346, %v604
        %v626 = vmul.f32 %v347, %v608
        %v627 = vmul.f32 %v348, %v612
        %v628 = vmul.f32 %v349, %v616
        %v629 = vmul.f32 %v594, %v604
        %v630 = vmul.f32 %v595, %v608
        %v631 = vmul.f32 %v596, %v612
        %v632 = vmul.f32 %v597, %v616
        %vm645 = vcmask 1046528
        %v646 = vrot.slane %v621, 1
        %v647 = vrot.slane %v625, 1
        %v648 = vsel %vm645, %v646, %v647
        %v649 = vrot.slane %v622, 1
        %v650 = vrot.slane %v626, 1
        %v651 = vsel %vm645, %v649, %v650
        %v652 = vrot.slane %v623, 1
        %v653 = vrot.slane %v627, 1
        %v654 = vsel %vm645, %v652, %v653
        %v655 = vrot.slane %v624, 1
        %v656 = vrot.slane %v628, 1
        %v657 = vsel %vm645, %v655, %v656
        %v658 = vrot.slane %v629, 1
        %v659 = vsel %vm645, %v647, %v658
        %v660 = vrot.slane %v630, 1
        %v661 = vsel %vm645, %v650, %v660
        %v662 = vrot.slane %v631, 1
        %v663 = vsel %vm645, %v653, %v662
        %v664 = vrot.slane %v632, 1
        %v665 = vsel %vm645, %v656, %v664
        %v674 = vadd.f32 %v582, %v648
        %v675 = vadd.f32 %v583, %v651
        %v676 = vadd.f32 %v584, %v654
        %v677 = vadd.f32 %v585, %v657
        %v678 = vadd.f32 %v586, %v659
        %v679 = vadd.f32 %v587, %v661
        %v680 = vadd.f32 %v588, %v663
        %v681 = vadd.f32 %v589, %v665
        %v682 = vld [vmem:[#allocation2 + $0x20] sm:$0xfe]
        %v683 = vld [vmem:[#allocation2 + $0x70] sm:$0x1]
        %s684 = scalar_lea.vmem [#allocation6], 4
        %v685 = vld [vmem:[%s684] ss:$8 sm:$0xf]
        %v687 = vlaneseq
        %v688 = vshrl.u32 %v687, 7
        %v689 = vsub.s32 0, %v688
        %v690 = vrot.slane %v685, %v689
        %v691 = vlaneseq
        %v692 = vshrl.u32 %v691, 7
        %v693 = vsub.s32 1, %v692
        %v694 = vrot.slane %v685, %v693
        %v695 = vlaneseq
        %v696 = vshrl.u32 %v695, 7
        %v697 = vsub.s32 2, %v696
        %v698 = vrot.slane %v685, %v697
        %v699 = vlaneseq
        %v700 = vshrl.u32 %v699, 7
        %v701 = vsub.s32 3, %v700
        %v702 = vrot.slane %v685, %v701
        %703 = vrot.lane.b32.xlu0 %v690, 32
        %v704 = vpop.permute.xlu0 %703
        %705 = vrot.lane.b32.xlu0 %v694, 32
        %v706 = vpop.permute.xlu0 %705
        %707 = vrot.lane.b32.xlu0 %v698, 32
        %v708 = vpop.permute.xlu0 %707
        %709 = vrot.lane.b32.xlu0 %v702, 32
        %v710 = vpop.permute.xlu0 %709
        %v711 = vsel %vm213, %v704, %v706
        %v712 = vsel %vm213, %v706, %v708
        %v713 = vsel %vm213, %v708, %v710
        %v719 = vmul.f32 %v590, %v704
        %v720 = vmul.f32 %v591, %v711
        %v721 = vmul.f32 %v592, %v712
        %v722 = vmul.f32 %v593, %v713
        %v723 = vmul.f32 %v682, %v710
        %v724 = vmul.f32 %v346, %v704
        %v725 = vmul.f32 %v347, %v711
        %v726 = vmul.f32 %v348, %v712
        %v727 = vmul.f32 %v349, %v713
        %v728 = vmul.f32 %v389, %v710
        %v729 = vmul.f32 %v594, %v704
        %v730 = vmul.f32 %v595, %v711
        %v731 = vmul.f32 %v596, %v712
        %v732 = vmul.f32 %v597, %v713
        %v733 = vmul.f32 %v683, %v710
        %v749 = vrot.slane %v719, 1
        %v750 = vrot.slane %v724, 1
        %v751 = vsel %vm645, %v749, %v750
        %v752 = vrot.slane %v720, 1
        %v753 = vrot.slane %v725, 1
        %v754 = vsel %vm645, %v752, %v753
        %v755 = vrot.slane %v721, 1
        %v756 = vrot.slane %v726, 1
        %v757 = vsel %vm645, %v755, %v756
        %v758 = vrot.slane %v722, 1
        %v759 = vrot.slane %v727, 1
        %v760 = vsel %vm645, %v758, %v759
        %v761 = vrot.slane %v723, 1
        %v762 = vrot.slane %v728, 1
        %v763 = vsel %vm645, %v761, %v762
        %v764 = vrot.slane %v729, 1
        %v765 = vsel %vm645, %v750, %v764
        %v766 = vrot.slane %v730, 1
        %v767 = vsel %vm645, %v753, %v766
        %v768 = vrot.slane %v731, 1
        %v769 = vsel %vm645, %v756, %v768
        %v770 = vrot.slane %v732, 1
        %v771 = vsel %vm645, %v759, %v770
        %v772 = vrot.slane %v733, 1
        %v773 = vsel %vm645, %v762, %v772
        %774 = vrot.lane.b32.xlu0 %v751, 96
        %v775 = vpop.permute.xlu0 %774
        %776 = vrot.lane.b32.xlu0 %v754, 96
        %v777 = vpop.permute.xlu0 %776
        %778 = vrot.lane.b32.xlu0 %v757, 96
        %v779 = vpop.permute.xlu0 %778
        %780 = vrot.lane.b32.xlu0 %v760, 96
        %v781 = vpop.permute.xlu0 %780
        %782 = vrot.lane.b32.xlu0 %v763, 96
        %v783 = vpop.permute.xlu0 %782
        %784 = vrot.lane.b32.xlu0 %v765, 96
        %v785 = vpop.permute.xlu0 %784
        %786 = vrot.lane.b32.xlu0 %v767, 96
        %v787 = vpop.permute.xlu0 %786
        %788 = vrot.lane.b32.xlu0 %v769, 96
        %v789 = vpop.permute.xlu0 %788
        %790 = vrot.lane.b32.xlu0 %v771, 96
        %v791 = vpop.permute.xlu0 %790
        %792 = vrot.lane.b32.xlu0 %v773, 96
        %v793 = vpop.permute.xlu0 %792
        %v794 = vsel %vm465, %v775, %v777
        %v795 = vsel %vm465, %v777, %v779
        %v796 = vsel %vm465, %v779, %v781
        %v797 = vsel %vm465, %v781, %v783
        %v798 = vsel %vm465, %v785, %v787
        %v799 = vsel %vm465, %v787, %v789
        %v800 = vsel %vm465, %v789, %v791
        %v801 = vsel %vm465, %v791, %v793
        %v810 = vadd.f32 %v674, %v794
        %v811 = vadd.f32 %v675, %v795
        %v812 = vadd.f32 %v676, %v796
        %v813 = vadd.f32 %v677, %v797
        %v814 = vadd.f32 %v678, %v798
        %v815 = vadd.f32 %v679, %v799
        %v816 = vadd.f32 %v680, %v800
        %v817 = vadd.f32 %v681, %v801
        %s818 = scalar_lea.vmem [#allocation6], 5
        %v819 = vld [vmem:[%s818] ss:$8 sm:$0xf]
        %v821 = vlaneseq
        %v822 = vshrl.u32 %v821, 7
        %v823 = vsub.s32 0, %v822
        %v824 = vrot.slane %v819, %v823
        %v825 = vlaneseq
        %v826 = vshrl.u32 %v825, 7
        %v827 = vsub.s32 1, %v826
        %v828 = vrot.slane %v819, %v827
        %v829 = vlaneseq
        %v830 = vshrl.u32 %v829, 7
        %v831 = vsub.s32 2, %v830
        %v832 = vrot.slane %v819, %v831
        %v833 = vlaneseq
        %v834 = vshrl.u32 %v833, 7
        %v835 = vsub.s32 3, %v834
        %v836 = vrot.slane %v819, %v835
        %837 = vrot.lane.b32.xlu0 %v824, 64
        %v838 = vpop.permute.xlu0 %837
        %839 = vrot.lane.b32.xlu0 %v828, 64
        %v840 = vpop.permute.xlu0 %839
        %841 = vrot.lane.b32.xlu0 %v832, 64
        %v842 = vpop.permute.xlu0 %841
        %843 = vrot.lane.b32.xlu0 %v836, 64
        %v844 = vpop.permute.xlu0 %843
        %v845 = vsel %vm517, %v838, %v840
        %v846 = vsel %vm517, %v840, %v842
        %v847 = vsel %vm517, %v842, %v844
        %v853 = vmul.f32 %v590, %v838
        %v854 = vmul.f32 %v591, %v845
        %v855 = vmul.f32 %v592, %v846
        %v856 = vmul.f32 %v593, %v847
        %v857 = vmul.f32 %v682, %v844
        %v858 = vmul.f32 %v346, %v838
        %v859 = vmul.f32 %v347, %v845
        %v860 = vmul.f32 %v348, %v846
        %v861 = vmul.f32 %v349, %v847
        %v862 = vmul.f32 %v389, %v844
        %v863 = vmul.f32 %v594, %v838
        %v864 = vmul.f32 %v595, %v845
        %v865 = vmul.f32 %v596, %v846
        %v866 = vmul.f32 %v597, %v847
        %v867 = vmul.f32 %v683, %v844
        %v883 = vrot.slane %v853, 1
        %v884 = vrot.slane %v858, 1
        %v885 = vsel %vm645, %v883, %v884
        %v886 = vrot.slane %v854, 1
        %v887 = vrot.slane %v859, 1
        %v888 = vsel %vm645, %v886, %v887
        %v889 = vrot.slane %v855, 1
        %v890 = vrot.slane %v860, 1
        %v891 = vsel %vm645, %v889, %v890
        %v892 = vrot.slane %v856, 1
        %v893 = vrot.slane %v861, 1
        %v894 = vsel %vm645, %v892, %v893
        %v895 = vrot.slane %v857, 1
        %v896 = vrot.slane %v862, 1
        %v897 = vsel %vm645, %v895, %v896
        %v898 = vrot.slane %v863, 1
        %v899 = vsel %vm645, %v884, %v898
        %v900 = vrot.slane %v864, 1
        %v901 = vsel %vm645, %v887, %v900
        %v902 = vrot.slane %v865, 1
        %v903 = vsel %vm645, %v890, %v902
        %v904 = vrot.slane %v866, 1
        %v905 = vsel %vm645, %v893, %v904
        %v906 = vrot.slane %v867, 1
        %v907 = vsel %vm645, %v896, %v906
        %908 = vrot.lane.b32.xlu0 %v885, 64
        %v909 = vpop.permute.xlu0 %908
        %910 = vrot.lane.b32.xlu0 %v888, 64
        %v911 = vpop.permute.xlu0 %910
        %912 = vrot.lane.b32.xlu0 %v891, 64
        %v913 = vpop.permute.xlu0 %912
        %914 = vrot.lane.b32.xlu0 %v894, 64
        %v915 = vpop.permute.xlu0 %914
        %916 = vrot.lane.b32.xlu0 %v897, 64
        %v917 = vpop.permute.xlu0 %916
        %918 = vrot.lane.b32.xlu0 %v899, 64
        %v919 = vpop.permute.xlu0 %918
        %920 = vrot.lane.b32.xlu0 %v901, 64
        %v921 = vpop.permute.xlu0 %920
        %922 = vrot.lane.b32.xlu0 %v903, 64
        %v923 = vpop.permute.xlu0 %922
        %924 = vrot.lane.b32.xlu0 %v905, 64
        %v925 = vpop.permute.xlu0 %924
        %926 = vrot.lane.b32.xlu0 %v907, 64
        %v927 = vpop.permute.xlu0 %926
        %v928 = vsel %vm517, %v909, %v911
        %v929 = vsel %vm517, %v911, %v913
        %v930 = vsel %vm517, %v913, %v915
        %v931 = vsel %vm517, %v915, %v917
        %v932 = vsel %vm517, %v919, %v921
        %v933 = vsel %vm517, %v921, %v923
        %v934 = vsel %vm517, %v923, %v925
        %v935 = vsel %vm517, %v925, %v927
        %v944 = vadd.f32 %v810, %v928
        %v945 = vadd.f32 %v811, %v929
        %v946 = vadd.f32 %v812, %v930
        %v947 = vadd.f32 %v813, %v931
        %v948 = vadd.f32 %v814, %v932
        %v949 = vadd.f32 %v815, %v933
        %v950 = vadd.f32 %v816, %v934
        %v951 = vadd.f32 %v817, %v935
        %v952 = vld [vmem:[#allocation2] sm:$0xfc]
        %v953 = vld [vmem:[#allocation2 + $0x8] sm:$0xfc]
        %v954 = vld [vmem:[#allocation2 + $0x10] sm:$0xfc]
        %v955 = vld [vmem:[#allocation2 + $0x18] sm:$0xfc]
        %v956 = vld [vmem:[#allocation2 + $0x50] sm:$0x3]
        %v957 = vld [vmem:[#allocation2 + $0x58] sm:$0x3]
        %v958 = vld [vmem:[#allocation2 + $0x60] sm:$0x3]
        %v959 = vld [vmem:[#allocation2 + $0x68] sm:$0x3]
        %s960 = scalar_lea.vmem [#allocation6], 6
        %v961 = vld [vmem:[%s960] ss:$8 sm:$0xf]
        %v963 = vlaneseq
        %v964 = vshrl.u32 %v963, 7
        %v965 = vsub.s32 0, %v964
        %v966 = vrot.slane %v961, %v965
        %v967 = vlaneseq
        %v968 = vshrl.u32 %v967, 7
        %v969 = vsub.s32 1, %v968
        %v970 = vrot.slane %v961, %v969
        %v971 = vlaneseq
        %v972 = vshrl.u32 %v971, 7
        %v973 = vsub.s32 2, %v972
        %v974 = vrot.slane %v961, %v973
        %v975 = vlaneseq
        %v976 = vshrl.u32 %v975, 7
        %v977 = vsub.s32 3, %v976
        %v978 = vrot.slane %v961, %v977
        %v983 = vmul.f32 %v952, %v966
        %v984 = vmul.f32 %v953, %v970
        %v985 = vmul.f32 %v954, %v974
        %v986 = vmul.f32 %v955, %v978
        %v987 = vmul.f32 %v346, %v966
        %v988 = vmul.f32 %v347, %v970
        %v989 = vmul.f32 %v348, %v974
        %v990 = vmul.f32 %v349, %v978
        %v991 = vmul.f32 %v956, %v966
        %v992 = vmul.f32 %v957, %v970
        %v993 = vmul.f32 %v958, %v974
        %v994 = vmul.f32 %v959, %v978
        %vm1007 = vcmask 1045504
        %v1008 = vrot.slane %v983, 2
        %v1009 = vrot.slane %v987, 2
        %v1010 = vsel %vm1007, %v1008, %v1009
        %v1011 = vrot.slane %v984, 2
        %v1012 = vrot.slane %v988, 2
        %v1013 = vsel %vm1007, %v1011, %v1012
        %v1014 = vrot.slane %v985, 2
        %v1015 = vrot.slane %v989, 2
        %v1016 = vsel %vm1007, %v1014, %v1015
        %v1017 = vrot.slane %v986, 2
        %v1018 = vrot.slane %v990, 2
        %v1019 = vsel %vm1007, %v1017, %v1018
        %v1020 = vrot.slane %v991, 2
        %v1021 = vsel %vm1007, %v1009, %v1020
        %v1022 = vrot.slane %v992, 2
        %v1023 = vsel %vm1007, %v1012, %v1022
        %v1024 = vrot.slane %v993, 2
        %v1025 = vsel %vm1007, %v1015, %v1024
        %v1026 = vrot.slane %v994, 2
        %v1027 = vsel %vm1007, %v1018, %v1026
        %v1036 = vadd.f32 %v944, %v1010
        %v1037 = vadd.f32 %v945, %v1013
        %v1038 = vadd.f32 %v946, %v1016
        %v1039 = vadd.f32 %v947, %v1019
        %v1040 = vadd.f32 %v948, %v1021
        %v1041 = vadd.f32 %v949, %v1023
        %v1042 = vadd.f32 %v950, %v1025
        %v1043 = vadd.f32 %v951, %v1027
        %v1044 = vld [vmem:[#allocation2 + $0x20] sm:$0xfc]
        %v1045 = vld [vmem:[#allocation2 + $0x70] sm:$0x3]
        %s1046 = scalar_lea.vmem [#allocation6], 7
        %v1047 = vld [vmem:[%s1046] ss:$8 sm:$0xf]
        %v1049 = vlaneseq
        %v1050 = vshrl.u32 %v1049, 7
        %v1051 = vsub.s32 0, %v1050
        %v1052 = vrot.slane %v1047, %v1051
        %v1053 = vlaneseq
        %v1054 = vshrl.u32 %v1053, 7
        %v1055 = vsub.s32 1, %v1054
        %v1056 = vrot.slane %v1047, %v1055
        %v1057 = vlaneseq
        %v1058 = vshrl.u32 %v1057, 7
        %v1059 = vsub.s32 2, %v1058
        %v1060 = vrot.slane %v1047, %v1059
        %v1061 = vlaneseq
        %v1062 = vshrl.u32 %v1061, 7
        %v1063 = vsub.s32 3, %v1062
        %v1064 = vrot.slane %v1047, %v1063
        %1065 = vrot.lane.b32.xlu0 %v1052, 32
        %v1066 = vpop.permute.xlu0 %1065
        %1067 = vrot.lane.b32.xlu0 %v1056, 32
        %v1068 = vpop.permute.xlu0 %1067
        %1069 = vrot.lane.b32.xlu0 %v1060, 32
        %v1070 = vpop.permute.xlu0 %1069
        %1071 = vrot.lane.b32.xlu0 %v1064, 32
        %v1072 = vpop.permute.xlu0 %1071
        %v1073 = vsel %vm213, %v1066, %v1068
        %v1074 = vsel %vm213, %v1068, %v1070
        %v1075 = vsel %vm213, %v1070, %v1072
        %v1081 = vmul.f32 %v952, %v1066
        %v1082 = vmul.f32 %v953, %v1073
        %v1083 = vmul.f32 %v954, %v1074
        %v1084 = vmul.f32 %v955, %v1075
        %v1085 = vmul.f32 %v1044, %v1072
        %v1086 = vmul.f32 %v346, %v1066
        %v1087 = vmul.f32 %v347, %v1073
        %v1088 = vmul.f32 %v348, %v1074
        %v1089 = vmul.f32 %v349, %v1075
        %v1090 = vmul.f32 %v389, %v1072
        %v1091 = vmul.f32 %v956, %v1066
        %v1092 = vmul.f32 %v957, %v1073
        %v1093 = vmul.f32 %v958, %v1074
        %v1094 = vmul.f32 %v959, %v1075
        %v1095 = vmul.f32 %v1045, %v1072
        %v1111 = vrot.slane %v1081, 2
        %v1112 = vrot.slane %v1086, 2
        %v1113 = vsel %vm1007, %v1111, %v1112
        %v1114 = vrot.slane %v1082, 2
        %v1115 = vrot.slane %v1087, 2
        %v1116 = vsel %vm1007, %v1114, %v1115
        %v1117 = vrot.slane %v1083, 2
        %v1118 = vrot.slane %v1088, 2
        %v1119 = vsel %vm1007, %v1117, %v1118
        %v1120 = vrot.slane %v1084, 2
        %v1121 = vrot.slane %v1089, 2
        %v1122 = vsel %vm1007, %v1120, %v1121
        %v1123 = vrot.slane %v1085, 2
        %v1124 = vrot.slane %v1090, 2
        %v1125 = vsel %vm1007, %v1123, %v1124
        %v1126 = vrot.slane %v1091, 2
        %v1127 = vsel %vm1007, %v1112, %v1126
        %v1128 = vrot.slane %v1092, 2
        %v1129 = vsel %vm1007, %v1115, %v1128
        %v1130 = vrot.slane %v1093, 2
        %v1131 = vsel %vm1007, %v1118, %v1130
        %v1132 = vrot.slane %v1094, 2
        %v1133 = vsel %vm1007, %v1121, %v1132
        %v1134 = vrot.slane %v1095, 2
        %v1135 = vsel %vm1007, %v1124, %v1134
        %1136 = vrot.lane.b32.xlu0 %v1113, 96
        %v1137 = vpop.permute.xlu0 %1136
        %1138 = vrot.lane.b32.xlu0 %v1116, 96
        %v1139 = vpop.permute.xlu0 %1138
        %1140 = vrot.lane.b32.xlu0 %v1119, 96
        %v1141 = vpop.permute.xlu0 %1140
        %1142 = vrot.lane.b32.xlu0 %v1122, 96
        %v1143 = vpop.permute.xlu0 %1142
        %1144 = vrot.lane.b32.xlu0 %v1125, 96
        %v1145 = vpop.permute.xlu0 %1144
        %1146 = vrot.lane.b32.xlu0 %v1127, 96
        %v1147 = vpop.permute.xlu0 %1146
        %1148 = vrot.lane.b32.xlu0 %v1129, 96
        %v1149 = vpop.permute.xlu0 %1148
        %1150 = vrot.lane.b32.xlu0 %v1131, 96
        %v1151 = vpop.permute.xlu0 %1150
        %1152 = vrot.lane.b32.xlu0 %v1133, 96
        %v1153 = vpop.permute.xlu0 %1152
        %1154 = vrot.lane.b32.xlu0 %v1135, 96
        %v1155 = vpop.permute.xlu0 %1154
        %v1156 = vsel %vm465, %v1137, %v1139
        %v1157 = vsel %vm465, %v1139, %v1141
        %v1158 = vsel %vm465, %v1141, %v1143
        %v1159 = vsel %vm465, %v1143, %v1145
        %v1160 = vsel %vm465, %v1147, %v1149
        %v1161 = vsel %vm465, %v1149, %v1151
        %v1162 = vsel %vm465, %v1151, %v1153
        %v1163 = vsel %vm465, %v1153, %v1155
        %v1172 = vadd.f32 %v1036, %v1156
        %v1173 = vadd.f32 %v1037, %v1157
        %v1174 = vadd.f32 %v1038, %v1158
        %v1175 = vadd.f32 %v1039, %v1159
        %v1176 = vadd.f32 %v1040, %v1160
        %v1177 = vadd.f32 %v1041, %v1161
        %v1178 = vadd.f32 %v1042, %v1162
        %v1179 = vadd.f32 %v1043, %v1163
        %s1180 = scalar_lea.vmem [#allocation6], 32
        %v1181 = vld [vmem:[%s1180] ss:$8 sm:$0xf]
        %v1183 = vlaneseq
        %v1184 = vshrl.u32 %v1183, 7
        %v1185 = vsub.s32 0, %v1184
        %v1186 = vrot.slane %v1181, %v1185
        %v1187 = vlaneseq
        %v1188 = vshrl.u32 %v1187, 7
        %v1189 = vsub.s32 1, %v1188
        %v1190 = vrot.slane %v1181, %v1189
        %v1191 = vlaneseq
        %v1192 = vshrl.u32 %v1191, 7
        %v1193 = vsub.s32 2, %v1192
        %v1194 = vrot.slane %v1181, %v1193
        %v1195 = vlaneseq
        %v1196 = vshrl.u32 %v1195, 7
        %v1197 = vsub.s32 3, %v1196
        %v1198 = vrot.slane %v1181, %v1197
        %1199 = vrot.lane.b32.xlu0 %v1186, 64
        %v1200 = vpop.permute.xlu0 %1199
        %1201 = vrot.lane.b32.xlu0 %v1190, 64
        %v1202 = vpop.permute.xlu0 %1201
        %1203 = vrot.lane.b32.xlu0 %v1194, 64
        %v1204 = vpop.permute.xlu0 %1203
        %1205 = vrot.lane.b32.xlu0 %v1198, 64
        %v1206 = vpop.permute.xlu0 %1205
        %v1207 = vsel %vm517, %v1200, %v1202
        %v1208 = vsel %vm517, %v1202, %v1204
        %v1209 = vsel %vm517, %v1204, %v1206
        %v1215 = vmul.f32 %v952, %v1200
        %v1216 = vmul.f32 %v953, %v1207
        %v1217 = vmul.f32 %v954, %v1208
        %v1218 = vmul.f32 %v955, %v1209
        %v1219 = vmul.f32 %v1044, %v1206
        %v1220 = vmul.f32 %v346, %v1200
        %v1221 = vmul.f32 %v347, %v1207
        %v1222 = vmul.f32 %v348, %v1208
        %v1223 = vmul.f32 %v349, %v1209
        %v1224 = vmul.f32 %v389, %v1206
        %v1225 = vmul.f32 %v956, %v1200
        %v1226 = vmul.f32 %v957, %v1207
        %v1227 = vmul.f32 %v958, %v1208
        %v1228 = vmul.f32 %v959, %v1209
        %v1229 = vmul.f32 %v1045, %v1206
        %v1245 = vrot.slane %v1215, 2
        %v1246 = vrot.slane %v1220, 2
        %v1247 = vsel %vm1007, %v1245, %v1246
        %v1248 = vrot.slane %v1216, 2
        %v1249 = vrot.slane %v1221, 2
        %v1250 = vsel %vm1007, %v1248, %v1249
        %v1251 = vrot.slane %v1217, 2
        %v1252 = vrot.slane %v1222, 2
        %v1253 = vsel %vm1007, %v1251, %v1252
        %v1254 = vrot.slane %v1218, 2
        %v1255 = vrot.slane %v1223, 2
        %v1256 = vsel %vm1007, %v1254, %v1255
        %v1257 = vrot.slane %v1219, 2
        %v1258 = vrot.slane %v1224, 2
        %v1259 = vsel %vm1007, %v1257, %v1258
        %v1260 = vrot.slane %v1225, 2
        %v1261 = vsel %vm1007, %v1246, %v1260
        %v1262 = vrot.slane %v1226, 2
        %v1263 = vsel %vm1007, %v1249, %v1262
        %v1264 = vrot.slane %v1227, 2
        %v1265 = vsel %vm1007, %v1252, %v1264
        %v1266 = vrot.slane %v1228, 2
        %v1267 = vsel %vm1007, %v1255, %v1266
        %v1268 = vrot.slane %v1229, 2
        %v1269 = vsel %vm1007, %v1258, %v1268
        %1270 = vrot.lane.b32.xlu0 %v1247, 64
        %v1271 = vpop.permute.xlu0 %1270
        %1272 = vrot.lane.b32.xlu0 %v1250, 64
        %v1273 = vpop.permute.xlu0 %1272
        %1274 = vrot.lane.b32.xlu0 %v1253, 64
        %v1275 = vpop.permute.xlu0 %1274
        %1276 = vrot.lane.b32.xlu0 %v1256, 64
        %v1277 = vpop.permute.xlu0 %1276
        %1278 = vrot.lane.b32.xlu0 %v1259, 64
        %v1279 = vpop.permute.xlu0 %1278
        %1280 = vrot.lane.b32.xlu0 %v1261, 64
        %v1281 = vpop.permute.xlu0 %1280
        %1282 = vrot.lane.b32.xlu0 %v1263, 64
        %v1283 = vpop.permute.xlu0 %1282
        %1284 = vrot.lane.b32.xlu0 %v1265, 64
        %v1285 = vpop.permute.xlu0 %1284
        %1286 = vrot.lane.b32.xlu0 %v1267, 64
        %v1287 = vpop.permute.xlu0 %1286
        %1288 = vrot.lane.b32.xlu0 %v1269, 64
        %v1289 = vpop.permute.xlu0 %1288
        %v1290 = vsel %vm517, %v1271, %v1273
        %v1291 = vsel %vm517, %v1273, %v1275
        %v1292 = vsel %vm517, %v1275, %v1277
        %v1293 = vsel %vm517, %v1277, %v1279
        %v1294 = vsel %vm517, %v1281, %v1283
        %v1295 = vsel %vm517, %v1283, %v1285
        %v1296 = vsel %vm517, %v1285, %v1287
        %v1297 = vsel %vm517, %v1287, %v1289
        %v1306 = vadd.f32 %v1172, %v1290
        %v1307 = vadd.f32 %v1173, %v1291
        %v1308 = vadd.f32 %v1174, %v1292
        %v1309 = vadd.f32 %v1175, %v1293
        %v1310 = vadd.f32 %v1176, %v1294
        %v1311 = vadd.f32 %v1177, %v1295
        %v1312 = vadd.f32 %v1178, %v1296
        %v1313 = vadd.f32 %v1179, %v1297
        %v1314 = vxor.u32 %v1306, 2147483648
        %v1315 = vxor.u32 %v1307, 2147483648
        %v1316 = vxor.u32 %v1308, 2147483648
        %v1317 = vxor.u32 %v1309, 2147483648
        %v1318 = vxor.u32 %v1310, 2147483648
        %v1319 = vxor.u32 %v1311, 2147483648
        %v1320 = vxor.u32 %v1312, 2147483648
        %v1321 = vxor.u32 %v1313, 2147483648
        %v1322 = vmul.f32 %v1314, 1.442695
        %v1323 = vpow.pop %v1322
        %v1324 = vmul.f32 %v1315, 1.442695
        %v1325 = vpow.pop %v1324
        %v1326 = vmul.f32 %v1316, 1.442695
        %v1327 = vpow.pop %v1326
        %v1328 = vmul.f32 %v1317, 1.442695
        %v1329 = vpow.pop %v1328
        %v1330 = vmul.f32 %v1318, 1.442695
        %v1331 = vpow.pop %v1330
        %v1332 = vmul.f32 %v1319, 1.442695
        %v1333 = vpow.pop %v1332
        %v1334 = vmul.f32 %v1320, 1.442695
        %v1335 = vpow.pop %v1334
        %v1336 = vmul.f32 %v1321, 1.442695
        %v1337 = vpow.pop %v1336
        %v1338 = vadd.f32 %v1323, 1.0
        %v1339 = vadd.f32 %v1325, 1.0
        %v1340 = vadd.f32 %v1327, 1.0
        %v1341 = vadd.f32 %v1329, 1.0
        %v1342 = vadd.f32 %v1331, 1.0
        %v1343 = vadd.f32 %v1333, 1.0
        %v1344 = vadd.f32 %v1335, 1.0
        %v1345 = vadd.f32 %v1337, 1.0
        %v1346 = vrcp.pop %v1338
        %v1347 = vmul.f32 1.0, %v1346
        %v1348 = vrcp.pop %v1339
        %v1349 = vmul.f32 1.0, %v1348
        %v1350 = vrcp.pop %v1340
        %v1351 = vmul.f32 1.0, %v1350
        %v1352 = vrcp.pop %v1341
        %v1353 = vmul.f32 1.0, %v1352
        %v1354 = vrcp.pop %v1342
        %v1355 = vmul.f32 1.0, %v1354
        %v1356 = vrcp.pop %v1343
        %v1357 = vmul.f32 1.0, %v1356
        %v1358 = vrcp.pop %v1344
        %v1359 = vmul.f32 1.0, %v1358
        %v1360 = vrcp.pop %v1345
        %v1361 = vmul.f32 1.0, %v1360
        %v1362 = vld [vmem:[%s177] sm:$0xff]
        %v1363 = vld [vmem:[%s177 + $0x8] sm:$0xff]
        %v1364 = vld [vmem:[%s177 + $0x10] sm:$0xff]
        %v1365 = vld [vmem:[%s177 + $0x18] sm:$0xff]
        %v1366 = vld [vmem:[%s177 + $0x20] sm:$0xff]
        %v1367 = vld [vmem:[%s177 + $0x28] sm:$0xff]
        %v1368 = vld [vmem:[%s177 + $0x30] sm:$0xff]
        %v1369 = vld [vmem:[%s177 + $0x38] sm:$0xff]
        %v1370 = vmul.f32 %v1362, %v1347
        %v1371 = vmul.f32 %v1363, %v1349
        %v1372 = vmul.f32 %v1364, %v1351
        %v1373 = vmul.f32 %v1365, %v1353
        %v1374 = vmul.f32 %v1366, %v1355
        %v1375 = vmul.f32 %v1367, %v1357
        %v1376 = vmul.f32 %v1368, %v1359
        %v1377 = vmul.f32 %v1369, %v1361
        %1378 = vst [vmem:[%s203] sm:$0xff] %v1370
        %1379 = vst [vmem:[%s203 + $0x8] sm:$0xff] %v1371
        %1380 = vst [vmem:[%s203 + $0x10] sm:$0xff] %v1372
        %1381 = vst [vmem:[%s203 + $0x18] sm:$0xff] %v1373
        %1382 = vst [vmem:[%s203 + $0x20] sm:$0xff] %v1374
        %1383 = vst [vmem:[%s203 + $0x28] sm:$0xff] %v1375
        %1384 = vst [vmem:[%s203 + $0x30] sm:$0xff] %v1376
        %1385 = vst [vmem:[%s203 + $0x38] sm:$0xff] %v1377
        %s1386 = sand.u32 %s97, 1
        %s1387 = scalar_lea.sflag [#allocation5], %s1386
        %s1388 = sand.u32 %s97, 1
        %s1389 = smul.addr %s1388, 64
        %s1390 = scalar_lea.vmem [#allocation8], %s1389
        // Predicated region
        $region41: #{tpu_custom_call.1} parent=31 // pred_check
          %p1391 = pneg %p107
        $region42: #{tpu_custom_call.1} parent=31 // pred_check_branch
          %1393 = sbr.rel (%p1391) target = $region44
        $region43: #{tpu_custom_call.1} parent=31 // pred_region
          %s1395 = ssub.s32 1024, 1024
          %1396 = vsyncadd %s1387, %s1395
          %s1397 = smul.addr %s21, 8
          %s1398 = smul.addr %s1397, 128
          %s1399 = scalar_lea.hbm %s3, %s1398
          %s1400 = sshll.u32 %s1390, 4
          %s1401 = int_to_ptr.vmem [resolvable:$true] %s1400
          %1406 = dma.vmem_to_hbm [thread:$0]  %s1401, 1024, %s1399, %s1387, 512, 512, 32
        $region44: #{tpu_custom_call.1} parent=31 // pred_fallthru
          _
      $region32: #{tpu_custom_call.1} parent=5 // pred_fallthru
        _
      %p1407 = scmp.le.s32.totalorder 2, %s16
      // Predicated region
      $region45: #{tpu_custom_call.1} parent=5 // pred_check
        %p1408 = pneg %p1407
      $region46: #{tpu_custom_call.1} parent=5 // pred_check_branch
        %1410 = sbr.rel (%p1408) target = $region48
      $region47: #{tpu_custom_call.1} parent=5 // pred_region
        %s1411 = ssub.s32 %s16, 2
        // Predicated region
        $region49: #{tpu_custom_call.1} parent=47 // pred_check
          %p1412 = pneg %p113
        $region50: #{tpu_custom_call.1} parent=47 // pred_check_branch
          %1414 = sbr.rel (%p1412) target = $region52
        $region51: #{tpu_custom_call.1} parent=47 // pred_region
          %s1415 = sand.u32 %s98, 1
          %s1416 = scalar_lea.sflag [#allocation5], %s1415
          %s1417 = sand.u32 %s98, 1
          %s1418 = smul.addr %s1417, 64
          %s1419 = scalar_lea.vmem [#allocation8], %s1418
          %1420 = dma.done %s1416, 1024
        $region52: #{tpu_custom_call.1} parent=47 // pred_fallthru
          _
      $region48: #{tpu_custom_call.1} parent=5 // pred_fallthru
        _
    $region6: #{tpu_custom_call.1} parent=1 // loop_footer
      %s20 = sadd.s32 1, %s16
    $region7: #{tpu_custom_call.1} parent=1 // loop_footer_branch
      %15 = sbr.rel target = $region3
    $region8: #{tpu_custom_call.1} parent=1 // loop_exit
      _
    %1421 = vsyncpa [#allocation4], 1
    %s1422 = scalar_lea.sflag [#allocation4], 1
    %1423 = vsyncpa %s1422, 1
    %1424 = vsyncpa [#allocation7], 1
    %1425 = vsyncpa [#allocation5], 1
    %s1426 = scalar_lea.sflag [#allocation5], 1
    %1427 = vsyncpa %s1426, 1

</llo_original>
